<compile_context>
chip_gen: v7x
topology: tpu7x:2x2x1
jax: 0.10.0
libtpu: 0.0.40
codegen_flags: <defaults>
</compile_context>

<pallas_src>
import functools

import jax
import jax.numpy as jnp
from jax.experimental import pallas as pl
from jax.experimental.pallas import tpu as pltpu

LANE = 128          # lane width / feature padding multiple
PREF_TILE = 512     # preferred adjacency tile (512x512 bf16 = 0.5 MiB per buffer)


def _round_up(x, m):
    return ((x + m - 1) // m) * m


def _choose_tiles(n):
    n_pad = _round_up(n, LANE)
    if n_pad <= PREF_TILE:
        tm = tk = n_pad
    else:
        tm = tk = PREF_TILE
        n_pad = _round_up(n_pad, PREF_TILE)
    return n_pad, tm, tk


# ---------------------------------------------------------------------------
# Kernel 1: dense feature transform   Y = (optionally d ⊙ X) @ W (+ b) (+ ReLU)
# ---------------------------------------------------------------------------
def _dense_kernel(x_ref, d_ref, w_ref, b_ref, out_ref, *,
                  pre_scale, add_bias, apply_relu):
    x = x_ref[...]
    if pre_scale:  # fold the source-node (column) degree scale into X
        x = (x.astype(jnp.float32) * d_ref[...]).astype(jnp.bfloat16)
    y = jnp.dot(x, w_ref[...], preferred_element_type=jnp.float32)
    if add_bias:
        y = y + b_ref[...]
    if apply_relu:
        y = jnp.maximum(y, 0.0)
    out_ref[...] = y.astype(out_ref.dtype)


def dense_transform(x, d, w, b, *, pre_scale, add_bias, apply_relu, tm, out_dtype):
    n_pad, f_in = x.shape
    f_out = w.shape[1]
    kernel = functools.partial(_dense_kernel, pre_scale=pre_scale,
                               add_bias=add_bias, apply_relu=apply_relu)
    return pl.pallas_call(
        kernel,
        out_shape=jax.ShapeDtypeStruct((n_pad, f_out), out_dtype),
        grid_spec=pltpu.PrefetchScalarGridSpec(
            num_scalar_prefetch=0,
            grid=(n_pad // tm,),
            in_specs=[
                pl.BlockSpec((tm, f_in), lambda i: (i, 0)),
                pl.BlockSpec((tm, 1), lambda i: (i, 0)),
                pl.BlockSpec((f_in, f_out), lambda i: (0, 0)),
                pl.BlockSpec((1, f_out), lambda i: (0, 0)),
            ],
            out_specs=pl.BlockSpec((tm, f_out), lambda i: (i, 0)),
        ),
        compiler_params=pltpu.CompilerParams(
            dimension_semantics=("parallel",),
            vmem_limit_bytes=32 * 1024 * 1024,
        ),
        cost_estimate=pl.CostEstimate(
            flops=2 * n_pad * f_in * f_out,
            transcendentals=0,
            bytes_accessed=n_pad * f_in * 2 + f_in * f_out * 2
            + n_pad * f_out * jnp.dtype(out_dtype).itemsize,
        ),
    )(x, d, w, b)


# ---------------------------------------------------------------------------
# Kernel 2: tiled neighborhood aggregation
#   OUT[i] = d_row[i] * sum_k A[i,k] @ (d_col[k] ⊙ X[k]) (+ b) (+ ReLU)
# ---------------------------------------------------------------------------
def _aggregate_kernel(adj_ref, x_ref, dcol_ref, drow_ref, b_ref, out_ref, acc_ref,
                      *, scale_cols, add_bias, apply_relu):
    k = pl.program_id(1)

    @pl.when(k == 0)
    def _():
        acc_ref[...] = jnp.zeros_like(acc_ref)

    x = x_ref[...]
    if scale_cols:  # fold D^{-1/2} (source side) into the feature tile
        x = (x.astype(jnp.float32) * dcol_ref[...]).astype(jnp.bfloat16)
    acc_ref[...] += jnp.dot(adj_ref[...], x, preferred_element_type=jnp.float32)

    @pl.when(k == pl.num_programs(1) - 1)
    def _():
        y = acc_ref[...] * drow_ref[...]   # D^{-1/2} (destination side)
        if add_bias:
            y = y + b_ref[...]
        if apply_relu:
            y = jnp.maximum(y, 0.0)
        out_ref[...] = y.astype(out_ref.dtype)


def aggregate(adj, x, d, b, *, scale_cols, add_bias, apply_relu, tm, tk, out_dtype):
    n_pad = adj.shape[0]
    f = x.shape[1]
    kernel = functools.partial(_aggregate_kernel, scale_cols=scale_cols,
                               add_bias=add_bias, apply_relu=apply_relu)
    return pl.pallas_call(
        kernel,
        out_shape=jax.ShapeDtypeStruct((n_pad, f), out_dtype),
        grid_spec=pltpu.PrefetchScalarGridSpec(
            num_scalar_prefetch=0,
            grid=(n_pad // tm, n_pad // tk),
            in_specs=[
                pl.BlockSpec((tm, tk), lambda i, k: (i, k)),   # A + I tile (bf16)
                pl.BlockSpec((tk, f), lambda i, k: (k, 0)),    # source features
                pl.BlockSpec((tk, 1), lambda i, k: (k, 0)),    # column scale
                pl.BlockSpec((tm, 1), lambda i, k: (i, 0)),    # row scale
                pl.BlockSpec((1, f), lambda i, k: (0, 0)),     # bias
            ],
            out_specs=pl.BlockSpec((tm, f), lambda i, k: (i, 0)),
            scratch_shapes=[pltpu.VMEM((tm, f), jnp.float32)],
        ),
        compiler_params=pltpu.CompilerParams(
            dimension_semantics=("parallel", "arbitrary"),
            vmem_limit_bytes=32 * 1024 * 1024,
        ),
        cost_estimate=pl.CostEstimate(
            flops=2 * n_pad * n_pad * f,
            transcendentals=0,
            bytes_accessed=n_pad * n_pad * 2 + n_pad * f * 2
            + n_pad * f * jnp.dtype(out_dtype).itemsize,
        ),
    )(adj, x, d, d, b)


# ---------------------------------------------------------------------------
# One GCNConv layer: pick the cheaper matmul order per layer.
# ---------------------------------------------------------------------------
def gcn_layer(adj, d, x, w, b, *, apply_relu, tm, tk, out_dtype):
    f_in, f_out = w.shape
    if f_out < f_in:
        # transform first: N^2 contraction runs over the narrower output width
        t = dense_transform(x, d, w, b, pre_scale=True, add_bias=False,
                            apply_relu=False, tm=tm, out_dtype=jnp.bfloat16)
        return aggregate(adj, t, d, b, scale_cols=False, add_bias=True,
                         apply_relu=apply_relu, tm=tm, tk=tk, out_dtype=out_dtype)
    # aggregate first
    h = aggregate(adj, x, d, b, scale_cols=True, add_bias=False,
                  apply_relu=False, tm=tm, tk=tk, out_dtype=jnp.bfloat16)
    return dense_transform(h, d, w, b, pre_scale=False, add_bias=True,
                           apply_relu=apply_relu, tm=tm, out_dtype=out_dtype)


# ---------------------------------------------------------------------------
# Graph glue (plain JAX): raw A + I in bf16 + degree scale vector (no scaled Ahat)
# ---------------------------------------------------------------------------
def build_normalization(edge_index, num_nodes, n_pad):
    src = edge_index[0]
    dst = edge_index[1]
    loops = jnp.arange(num_nodes, dtype=edge_index.dtype)
    src = jnp.concatenate([src, loops])
    dst = jnp.concatenate([dst, loops])
    # row = destination, col = source (PyG scatter-add semantics)
    a = jnp.zeros((num_nodes, num_nodes), jnp.float32).at[dst, src].add(1.0)
    deg = jnp.sum(a, axis=1)
    d_inv_sqrt = jnp.where(deg > 0, jax.lax.rsqrt(deg), 0.0)
    a_pad = jnp.zeros((n_pad, n_pad), jnp.bfloat16)
    a_pad = a_pad.at[:num_nodes, :num_nodes].set(a.astype(jnp.bfloat16))
    d_pad = jnp.zeros((n_pad, 1), jnp.float32).at[:num_nodes, 0].set(d_inv_sqrt)
    return a_pad, d_pad


def glorot(key, fan_in, fan_out):
    limit = (6.0 / (fan_in + fan_out)) ** 0.5
    return jax.random.uniform(key, (fan_in, fan_out), jnp.float32, -limit, limit)


def init_gcn_params(key, in_channels, hidden_channels, out_channels, num_layers=2):
    dims = [in_channels] + [hidden_channels] * (num_layers - 1) + [out_channels]
    params = []
    for i in range(num_layers):
        key, wk = jax.random.split(key)
        w = glorot(wk, dims[i], dims[i + 1])
        b = jnp.zeros((1, dims[i + 1]), jnp.float32)
        params.append((w, b))
    return params


@jax.jit
def gcn_forward(x, edge_index, params):
    """conv -> relu -> (dropout=id) for all but last, then conv."""
    n, f_in = x.shape
    out_channels = params[-1][0].shape[1]
    n_pad, tm, tk = _choose_tiles(n)
    adj, d = build_normalization(edge_index, n, n_pad)

    f_in_pad = _round_up(f_in, LANE)
    h = jnp.zeros((n_pad, f_in_pad), jnp.bfloat16).at[:n, :f_in].set(
        x.astype(jnp.bfloat16))

    num_layers = len(params)
    for i, (w, b) in enumerate(params):
        last = i == num_layers - 1
        fi, fo = w.shape
        fi_pad = _round_up(fi, LANE)
        fo_pad = _round_up(fo, LANE)
        assert fi_pad == h.shape[1]
        w_pad = jnp.zeros((fi_pad, fo_pad), jnp.bfloat16).at[:fi, :fo].set(
            w.astype(jnp.bfloat16))
        b_pad = jnp.zeros((1, fo_pad), jnp.float32).at[0, :fo].set(b.reshape(-1))
        h = gcn_layer(adj, d, h, w_pad, b_pad,
                      apply_relu=not last, tm=tm, tk=tk,
                      out_dtype=jnp.float32 if last else jnp.bfloat16)
        # dropout(p=0.2) is identity at inference
    return h[:n, :out_channels]


if __name__ == "__main__":
    key = jax.random.PRNGKey(0)
    kx, ke, kp = jax.random.split(key, 3)

    num_nodes = 16
    in_channels = 4
    hidden_channels = 32
    out_channels = 8
    num_edges = 40

    x = jax.random.normal(kx, (num_nodes, in_channels), jnp.float32)
    edge_index = jax.random.randint(ke, (2, num_edges), 0, num_nodes, dtype=jnp.int32)

    params = init_gcn_params(kp, in_channels, hidden_channels, out_channels,
                             num_layers=2)

    out = gcn_forward(x, edge_index, params)
    out = jax.block_until_ready(out)
    assert out.shape == (num_nodes, out_channels)
    assert jnp.all(jnp.isfinite(out))
    print("KERNEL_OK")
</pallas_src>

<mosaic_0001>
module attributes {stable_mosaic.version = 11 : i64} {
  func.func @_aggregate_kernel(%arg0: i32, %arg1: i32, %arg2: memref<128x128xbf16, #tpu.memory_space<vmem>>, %arg3: memref<128x128xbf16, #tpu.memory_space<vmem>>, %arg4: memref<128x1xf32, #tpu.memory_space<vmem>>, %arg5: memref<128x1xf32, #tpu.memory_space<vmem>>, %arg6: memref<1x128xf32, #tpu.memory_space<vmem>>, %arg7: memref<128x128xbf16, #tpu.memory_space<vmem>>, %arg8: memref<128x128xf32, #tpu.memory_space<vmem>>) attributes {dimension_semantics = [#tpu.dimension_semantics<parallel>, #tpu.dimension_semantics<arbitrary>], iteration_bounds = array<i64: 1, 1>, scalar_prefetch = 0 : i64, scratch_operands = 1 : i64, tpu.core_type = #tpu.core_type<tc>, window_params = [{transform_indices = @transform_0, window_bounds = array<i64: 128, 128>}, {transform_indices = @transform_1, window_bounds = array<i64: 128, 128>}, {transform_indices = @transform_2, window_bounds = array<i64: 128, 1>}, {transform_indices = @transform_3, window_bounds = array<i64: 128, 1>}, {pipeline_mode = #tpu.pipeline_mode<synchronous>, transform_indices = @transform_4, window_bounds = array<i64: 1, 128>}, {transform_indices = @transform_5, window_bounds = array<i64: 128, 128>}]} {
    %c0_i32 = arith.constant 0 : i32
    %0 = arith.cmpi eq, %arg1, %c0_i32 : i32
    %1 = arith.extui %0 : i1 to i32
    %c0_i32_0 = arith.constant 0 : i32
    %2 = arith.cmpi ne, %1, %c0_i32_0 : i32
    scf.if %2 {
      %cst_12 = arith.constant 0.000000e+00 : f32
      %17 = vector.broadcast %cst_12 : f32 to vector<128x128xf32>
      %c0_13 = arith.constant 0 : index
      %c0_14 = arith.constant 0 : index
      %18 = vector.load %arg8[%c0_13, %c0_14] : memref<128x128xf32, #tpu.memory_space<vmem>>, vector<128x128xf32>
      tpu.vector_store %arg8[%c0_13, %c0_14], %17 {strides = array<i32>} : memref<128x128xf32, #tpu.memory_space<vmem>>, vector<128x128xf32>,
    } else {
    }
    %c0 = arith.constant 0 : index
    %c0_1 = arith.constant 0 : index
    %3 = vector.load %arg3[%c0, %c0_1] : memref<128x128xbf16, #tpu.memory_space<vmem>>, vector<128x128xbf16>
    %4 = arith.extf %3 : vector<128x128xbf16> to vector<128x128xf32>
    %c0_2 = arith.constant 0 : index
    %c0_3 = arith.constant 0 : index
    %5 = vector.load %arg4[%c0_2, %c0_3] : memref<128x1xf32, #tpu.memory_space<vmem>>, vector<128x1xf32>
    %6 = vector.broadcast %5 : vector<128x1xf32> to vector<128x128xf32>
    %7 = arith.mulf %4, %6 : vector<128x128xf32>
    %8 = arith.truncf %7 : vector<128x128xf32> to vector<128x128xbf16>
    %c0_4 = arith.constant 0 : index
    %c0_5 = arith.constant 0 : index
    %9 = vector.load %arg8[%c0_4, %c0_5] : memref<128x128xf32, #tpu.memory_space<vmem>>, vector<128x128xf32>
    %c0_6 = arith.constant 0 : index
    %c0_7 = arith.constant 0 : index
    %10 = vector.load %arg2[%c0_6, %c0_7] : memref<128x128xbf16, #tpu.memory_space<vmem>>, vector<128x128xbf16>
    %cst = arith.constant dense<0.000000e+00> : vector<128x128xf32>
    %11 = tpu.matmul %10, %8, %cst {dimension_numbers = #tpu.dot_dimension_numbers<[1], [0], [0], [1], [0, 0, 1, 1], [], []>} : vector<128x128xbf16>, vector<128x128xbf16>, vector<128x128xf32> -> vector<128x128xf32>
    %12 = arith.addf %9, %11 : vector<128x128xf32>
    %c0_8 = arith.constant 0 : index
    %c0_9 = arith.constant 0 : index
    %13 = vector.load %arg8[%c0_8, %c0_9] : memref<128x128xf32, #tpu.memory_space<vmem>>, vector<128x128xf32>
    tpu.vector_store %arg8[%c0_8, %c0_9], %12 {strides = array<i32>} : memref<128x128xf32, #tpu.memory_space<vmem>>, vector<128x128xf32>,
    %c0_i32_10 = arith.constant 0 : i32
    %14 = arith.cmpi eq, %arg1, %c0_i32_10 : i32
    %15 = arith.extui %14 : i1 to i32
    %c0_i32_11 = arith.constant 0 : i32
    %16 = arith.cmpi ne, %15, %c0_i32_11 : i32
    scf.if %16 {
      %c0_12 = arith.constant 0 : index
      %c0_13 = arith.constant 0 : index
      %17 = vector.load %arg8[%c0_12, %c0_13] : memref<128x128xf32, #tpu.memory_space<vmem>>, vector<128x128xf32>
      %c0_14 = arith.constant 0 : index
      %c0_15 = arith.constant 0 : index
      %18 = vector.load %arg5[%c0_14, %c0_15] : memref<128x1xf32, #tpu.memory_space<vmem>>, vector<128x1xf32>
      %19 = vector.broadcast %18 : vector<128x1xf32> to vector<128x128xf32>
      %20 = arith.mulf %17, %19 : vector<128x128xf32>
      %21 = arith.truncf %20 : vector<128x128xf32> to vector<128x128xbf16>
      %c0_16 = arith.constant 0 : index
      %c0_17 = arith.constant 0 : index
      %22 = vector.load %arg7[%c0_16, %c0_17] : memref<128x128xbf16, #tpu.memory_space<vmem>>, vector<128x128xbf16>
      tpu.vector_store %arg7[%c0_16, %c0_17], %21 {strides = array<i32>} : memref<128x128xbf16, #tpu.memory_space<vmem>>, vector<128x128xbf16>,
    } else {
    }
    return
  }
  func.func @transform_0(%arg0: i32, %arg1: i32) -> (i32, i32) {
    %c0_i32 = arith.constant 0 : i32
    return %arg0, %arg1 : i32, i32
  }
  func.func @transform_1(%arg0: i32, %arg1: i32) -> (i32, i32) {
    %c0_i32 = arith.constant 0 : i32
    %c0_i32_0 = arith.constant 0 : i32
    return %arg1, %c0_i32 : i32, i32
  }
  func.func @transform_2(%arg0: i32, %arg1: i32) -> (i32, i32) {
    %c0_i32 = arith.constant 0 : i32
    %c0_i32_0 = arith.constant 0 : i32
    return %arg1, %c0_i32 : i32, i32
  }
  func.func @transform_3(%arg0: i32, %arg1: i32) -> (i32, i32) {
    %c0_i32 = arith.constant 0 : i32
    %c0_i32_0 = arith.constant 0 : i32
    return %arg0, %c0_i32 : i32, i32
  }
  func.func @transform_4(%arg0: i32, %arg1: i32) -> (i32, i32) {
    %c0_i32 = arith.constant 0 : i32
    %c0_i32_0 = arith.constant 0 : i32
    %c0_i32_1 = arith.constant 0 : i32
    return %c0_i32, %c0_i32_0 : i32, i32
  }
  func.func @transform_5(%arg0: i32, %arg1: i32) -> (i32, i32) {
    %c0_i32 = arith.constant 0 : i32
    %c0_i32_0 = arith.constant 0 : i32
    return %arg0, %c0_i32 : i32, i32
  }
}

module attributes {stable_mosaic.version = 11 : i64} {
  func.func @_dense_kernel(%arg0: i32, %arg1: memref<128x128xbf16, #tpu.memory_space<vmem>>, %arg2: memref<128x1xf32, #tpu.memory_space<vmem>>, %arg3: memref<128x128xbf16, #tpu.memory_space<vmem>>, %arg4: memref<1x128xf32, #tpu.memory_space<vmem>>, %arg5: memref<128x128xbf16, #tpu.memory_space<vmem>>) attributes {dimension_semantics = [#tpu.dimension_semantics<parallel>], iteration_bounds = array<i64: 1>, scalar_prefetch = 0 : i64, scratch_operands = 0 : i64, tpu.core_type = #tpu.core_type<tc>, window_params = [{transform_indices = @transform_0, window_bounds = array<i64: 128, 128>}, {transform_indices = @transform_1, window_bounds = array<i64: 128, 1>}, {pipeline_mode = #tpu.pipeline_mode<synchronous>, transform_indices = @transform_2, window_bounds = array<i64: 128, 128>}, {pipeline_mode = #tpu.pipeline_mode<synchronous>, transform_indices = @transform_3, window_bounds = array<i64: 1, 128>}, {transform_indices = @transform_4, window_bounds = array<i64: 128, 128>}]} {
    %c0 = arith.constant 0 : index
    %c0_0 = arith.constant 0 : index
    %0 = vector.load %arg1[%c0, %c0_0] : memref<128x128xbf16, #tpu.memory_space<vmem>>, vector<128x128xbf16>
    %c0_1 = arith.constant 0 : index
    %c0_2 = arith.constant 0 : index
    %1 = vector.load %arg3[%c0_1, %c0_2] : memref<128x128xbf16, #tpu.memory_space<vmem>>, vector<128x128xbf16>
    %cst = arith.constant dense<0.000000e+00> : vector<128x128xf32>
    %2 = tpu.matmul %0, %1, %cst {dimension_numbers = #tpu.dot_dimension_numbers<[1], [0], [0], [1], [0, 0, 1, 1], [], []>} : vector<128x128xbf16>, vector<128x128xbf16>, vector<128x128xf32> -> vector<128x128xf32>
    %c0_3 = arith.constant 0 : index
    %c0_4 = arith.constant 0 : index
    %3 = vector.load %arg4[%c0_3, %c0_4] : memref<1x128xf32, #tpu.memory_space<vmem>>, vector<1x128xf32>
    %4 = vector.broadcast %3 : vector<1x128xf32> to vector<128x128xf32>
    %5 = arith.addf %2, %4 : vector<128x128xf32>
    %cst_5 = arith.constant 0.000000e+00 : f32
    %6 = vector.broadcast %cst_5 : f32 to vector<128x128xf32>
    %7 = arith.maximumf %5, %6 : vector<128x128xf32>
    %8 = arith.truncf %7 : vector<128x128xf32> to vector<128x128xbf16>
    %c0_6 = arith.constant 0 : index
    %c0_7 = arith.constant 0 : index
    %9 = vector.load %arg5[%c0_6, %c0_7] : memref<128x128xbf16, #tpu.memory_space<vmem>>, vector<128x128xbf16>
    tpu.vector_store %arg5[%c0_6, %c0_7], %8 {strides = array<i32>} : memref<128x128xbf16, #tpu.memory_space<vmem>>, vector<128x128xbf16>,
    return
  }
  func.func @transform_0(%arg0: i32) -> (i32, i32) {
    %c0_i32 = arith.constant 0 : i32
    %c0_i32_0 = arith.constant 0 : i32
    return %arg0, %c0_i32 : i32, i32
  }
  func.func @transform_1(%arg0: i32) -> (i32, i32) {
    %c0_i32 = arith.constant 0 : i32
    %c0_i32_0 = arith.constant 0 : i32
    return %arg0, %c0_i32 : i32, i32
  }
  func.func @transform_2(%arg0: i32) -> (i32, i32) {
    %c0_i32 = arith.constant 0 : i32
    %c0_i32_0 = arith.constant 0 : i32
    %c0_i32_1 = arith.constant 0 : i32
    return %c0_i32, %c0_i32_0 : i32, i32
  }
  func.func @transform_3(%arg0: i32) -> (i32, i32) {
    %c0_i32 = arith.constant 0 : i32
    %c0_i32_0 = arith.constant 0 : i32
    %c0_i32_1 = arith.constant 0 : i32
    return %c0_i32, %c0_i32_0 : i32, i32
  }
  func.func @transform_4(%arg0: i32) -> (i32, i32) {
    %c0_i32 = arith.constant 0 : i32
    %c0_i32_0 = arith.constant 0 : i32
    return %arg0, %c0_i32 : i32, i32
  }
}

module attributes {stable_mosaic.version = 11 : i64} {
  func.func @_dense_kernel(%arg0: i32, %arg1: memref<128x128xbf16, #tpu.memory_space<vmem>>, %arg2: memref<128x1xf32, #tpu.memory_space<vmem>>, %arg3: memref<128x128xbf16, #tpu.memory_space<vmem>>, %arg4: memref<1x128xf32, #tpu.memory_space<vmem>>, %arg5: memref<128x128xf32, #tpu.memory_space<vmem>>) attributes {dimension_semantics = [#tpu.dimension_semantics<parallel>], iteration_bounds = array<i64: 1>, scalar_prefetch = 0 : i64, scratch_operands = 0 : i64, tpu.core_type = #tpu.core_type<tc>, window_params = [{transform_indices = @transform_0, window_bounds = array<i64: 128, 128>}, {transform_indices = @transform_1, window_bounds = array<i64: 128, 1>}, {pipeline_mode = #tpu.pipeline_mode<synchronous>, transform_indices = @transform_2, window_bounds = array<i64: 128, 128>}, {pipeline_mode = #tpu.pipeline_mode<synchronous>, transform_indices = @transform_3, window_bounds = array<i64: 1, 128>}, {transform_indices = @transform_4, window_bounds = array<i64: 128, 128>}]} {
    %c0 = arith.constant 0 : index
    %c0_0 = arith.constant 0 : index
    %0 = vector.load %arg1[%c0, %c0_0] : memref<128x128xbf16, #tpu.memory_space<vmem>>, vector<128x128xbf16>
    %c0_1 = arith.constant 0 : index
    %c0_2 = arith.constant 0 : index
    %1 = vector.load %arg3[%c0_1, %c0_2] : memref<128x128xbf16, #tpu.memory_space<vmem>>, vector<128x128xbf16>
    %cst = arith.constant dense<0.000000e+00> : vector<128x128xf32>
    %2 = tpu.matmul %0, %1, %cst {dimension_numbers = #tpu.dot_dimension_numbers<[1], [0], [0], [1], [0, 0, 1, 1], [], []>} : vector<128x128xbf16>, vector<128x128xbf16>, vector<128x128xf32> -> vector<128x128xf32>
    %c0_3 = arith.constant 0 : index
    %c0_4 = arith.constant 0 : index
    %3 = vector.load %arg4[%c0_3, %c0_4] : memref<1x128xf32, #tpu.memory_space<vmem>>, vector<1x128xf32>
    %4 = vector.broadcast %3 : vector<1x128xf32> to vector<128x128xf32>
    %5 = arith.addf %2, %4 : vector<128x128xf32>
    %c0_5 = arith.constant 0 : index
    %c0_6 = arith.constant 0 : index
    %6 = vector.load %arg5[%c0_5, %c0_6] : memref<128x128xf32, #tpu.memory_space<vmem>>, vector<128x128xf32>
    tpu.vector_store %arg5[%c0_5, %c0_6], %5 {strides = array<i32>} : memref<128x128xf32, #tpu.memory_space<vmem>>, vector<128x128xf32>,
    return
  }
  func.func @transform_0(%arg0: i32) -> (i32, i32) {
    %c0_i32 = arith.constant 0 : i32
    %c0_i32_0 = arith.constant 0 : i32
    return %arg0, %c0_i32 : i32, i32
  }
  func.func @transform_1(%arg0: i32) -> (i32, i32) {
    %c0_i32 = arith.constant 0 : i32
    %c0_i32_0 = arith.constant 0 : i32
    return %arg0, %c0_i32 : i32, i32
  }
  func.func @transform_2(%arg0: i32) -> (i32, i32) {
    %c0_i32 = arith.constant 0 : i32
    %c0_i32_0 = arith.constant 0 : i32
    %c0_i32_1 = arith.constant 0 : i32
    return %c0_i32, %c0_i32_0 : i32, i32
  }
  func.func @transform_3(%arg0: i32) -> (i32, i32) {
    %c0_i32 = arith.constant 0 : i32
    %c0_i32_0 = arith.constant 0 : i32
    %c0_i32_1 = arith.constant 0 : i32
    return %c0_i32, %c0_i32_0 : i32, i32
  }
  func.func @transform_4(%arg0: i32) -> (i32, i32) {
    %c0_i32 = arith.constant 0 : i32
    %c0_i32_0 = arith.constant 0 : i32
    return %arg0, %c0_i32 : i32, i32
  }
}

</mosaic_0001>

<llo_original>
// kernel: gcn_forward.5
$region0: #{gcn_forward.5}
  #allocation0 [shape = 'u32[]', space=smem, size = 0x4, offset = 0x4, fixed_abs, tag = 'smem constant byte address 0x4 - core index']
  #allocation1 [shape = 'u32[144,128]{1,0:T(1,128)}', space=vmem, size = 0x12000, scoped, tag = 'internal scratch']
  %s0 = inlined_call_operand.vmem [shape: bf16[128,128], index: 0, kind: input, shape index: {}]
  %s1 = inlined_call_operand.vmem [shape: f32[128,1], index: 1, kind: input, shape index: {}]
  %s2 = inlined_call_operand.vmem [shape: bf16[128,128], index: 2, kind: input, shape index: {}]
  %s3 = inlined_call_operand.vmem [shape: f32[1,128], index: 3, kind: input, shape index: {}]
  %s4 = inlined_call_operand.vmem [shape: bf16[128,128], index: 4, kind: output, shape index: {}]
  %s5 = sld [smem:[#allocation0]]
  $region26: #{gcn_forward.5} parent=0
    _
  %s7 = ssub.s32 1, %s5
  %s8 = scalar_select 0, %s7, %s5
  // Predicated region
  $region2: #{gcn_forward.5} parent=0 // pred_check
    _
  $region3: #{gcn_forward.5} parent=0 // pred_check_branch
    %10 = sbr.rel (0) target = $region5
  $region4: #{gcn_forward.5} parent=0 // pred_region
    _
  $region5: #{gcn_forward.5} parent=0 // pred_fallthru
    _
  // Predicated region
  $region6: #{gcn_forward.5} parent=0 // pred_check
    _
  $region7: #{gcn_forward.5} parent=0 // pred_check_branch
    %12 = sbr.rel (0) target = $region9
  $region8: #{gcn_forward.5} parent=0 // pred_region
    _
  $region9: #{gcn_forward.5} parent=0 // pred_fallthru
    _
  // Predicated region
  $region10: #{gcn_forward.5} parent=0 // pred_check
    _
  $region11: #{gcn_forward.5} parent=0 // pred_check_branch
    %14 = sbr.rel (0) target = $region13
  $region12: #{gcn_forward.5} parent=0 // pred_region
    _
  $region13: #{gcn_forward.5} parent=0 // pred_fallthru
    _
  // Predicated region
  $region14: #{gcn_forward.5} parent=0 // pred_check
    _
  $region15: #{gcn_forward.5} parent=0 // pred_check_branch
    %16 = sbr.rel (0) target = $region17
  $region16: #{gcn_forward.5} parent=0 // pred_region
    _
  $region17: #{gcn_forward.5} parent=0 // pred_fallthru
    _
  %v18 = vld [vmem:[%s0] sm:$0xf]
  %v19 = vld [vmem:[%s0 + $0x4] sm:$0xf]
  %v20 = vld [vmem:[%s0 + $0x8] sm:$0xf]
  %v21 = vld [vmem:[%s0 + $0xc] sm:$0xf]
  %v22 = vld [vmem:[%s0 + $0x10] sm:$0xf]
  %v23 = vld [vmem:[%s0 + $0x14] sm:$0xf]
  %v24 = vld [vmem:[%s0 + $0x18] sm:$0xf]
  %v25 = vld [vmem:[%s0 + $0x1c] sm:$0xf]
  %v26 = vld [vmem:[%s0 + $0x20] sm:$0xf]
  %v27 = vld [vmem:[%s0 + $0x24] sm:$0xf]
  %v28 = vld [vmem:[%s0 + $0x28] sm:$0xf]
  %v29 = vld [vmem:[%s0 + $0x2c] sm:$0xf]
  %v30 = vld [vmem:[%s0 + $0x30] sm:$0xf]
  %v31 = vld [vmem:[%s0 + $0x34] sm:$0xf]
  %v32 = vld [vmem:[%s0 + $0x38] sm:$0xf]
  %v33 = vld [vmem:[%s0 + $0x3c] sm:$0xf]
  %v34 = vld [vmem:[%s2] sm:$0xf]
  %v35 = vld [vmem:[%s2 + $0x4] sm:$0xf]
  %v36 = vld [vmem:[%s2 + $0x8] sm:$0xf]
  %v37 = vld [vmem:[%s2 + $0xc] sm:$0xf]
  %v38 = vld [vmem:[%s2 + $0x10] sm:$0xf]
  %v39 = vld [vmem:[%s2 + $0x14] sm:$0xf]
  %v40 = vld [vmem:[%s2 + $0x18] sm:$0xf]
  %v41 = vld [vmem:[%s2 + $0x1c] sm:$0xf]
  %v42 = vld [vmem:[%s2 + $0x20] sm:$0xf]
  %v43 = vld [vmem:[%s2 + $0x24] sm:$0xf]
  %v44 = vld [vmem:[%s2 + $0x28] sm:$0xf]
  %v45 = vld [vmem:[%s2 + $0x2c] sm:$0xf]
  %v46 = vld [vmem:[%s2 + $0x30] sm:$0xf]
  %v47 = vld [vmem:[%s2 + $0x34] sm:$0xf]
  %v48 = vld [vmem:[%s2 + $0x38] sm:$0xf]
  %v49 = vld [vmem:[%s2 + $0x3c] sm:$0xf]
  %v50 = vld [vmem:[%s3] sm:$0x1]
  %v52 = vlaneseq
  %v53 = vshrl.u32 %v52, 7
  %v54 = vsub.s32 0, %v53
  %v55 = vrot.slane %v50, %v54
  %v73 = vunpack.c.l.b16 %v18
  %v74 = vunpack.c.l.b16 %v19
  %v75 = vunpack.c.l.b16 %v20
  %v76 = vunpack.c.l.b16 %v21
  %v77 = vunpack.c.l.b16 %v22
  %v78 = vunpack.c.l.b16 %v23
  %v79 = vunpack.c.l.b16 %v24
  %v80 = vunpack.c.l.b16 %v25
  %v81 = vunpack.c.l.b16 %v26
  %v82 = vunpack.c.l.b16 %v27
  %v83 = vunpack.c.l.b16 %v28
  %v84 = vunpack.c.l.b16 %v29
  %v85 = vunpack.c.l.b16 %v30
  %v86 = vunpack.c.l.b16 %v31
  %v87 = vunpack.c.l.b16 %v32
  %v88 = vunpack.c.l.b16 %v33
  %v89 = vpack.c.b16 %v74, %v73
  %v90 = vpack.c.b16 %v76, %v75
  %v91 = vpack.c.b16 %v78, %v77
  %v92 = vpack.c.b16 %v80, %v79
  %v93 = vpack.c.b16 %v82, %v81
  %v94 = vpack.c.b16 %v84, %v83
  %v95 = vpack.c.b16 %v86, %v85
  %v96 = vpack.c.b16 %v88, %v87
  %v121 = vunpack.c.l.b16 %v34
  %v122 = vunpack.c.l.b16 %v35
  %v123 = vunpack.c.l.b16 %v36
  %v124 = vunpack.c.l.b16 %v37
  %v125 = vunpack.c.l.b16 %v38
  %v126 = vunpack.c.l.b16 %v39
  %v127 = vunpack.c.l.b16 %v40
  %v128 = vunpack.c.l.b16 %v41
  %v129 = vunpack.c.l.b16 %v42
  %v130 = vunpack.c.l.b16 %v43
  %v131 = vunpack.c.l.b16 %v44
  %v132 = vunpack.c.l.b16 %v45
  %v133 = vunpack.c.l.b16 %v46
  %v134 = vunpack.c.l.b16 %v47
  %v135 = vunpack.c.l.b16 %v48
  %v136 = vunpack.c.l.b16 %v49
  %v137 = vpack.c.b16 %v122, %v121
  %v138 = vpack.c.b16 %v124, %v123
  %v139 = vpack.c.b16 %v126, %v125
  %v140 = vpack.c.b16 %v128, %v127
  %v141 = vpack.c.b16 %v130, %v129
  %v142 = vpack.c.b16 %v132, %v131
  %v143 = vpack.c.b16 %v134, %v133
  %v144 = vpack.c.b16 %v136, %v135
  %153 = vmatprep.subr.bf16.mxu0 0
  %154 = vmatpush1.bf16.msra.mxu0 %v137
  %155 = vmatprep.subr.bf16.mxu0 0
  %156 = vmatpush1.bf16.msra.mxu0 %v138
  %157 = vmatprep.subr.bf16.mxu0 0
  %158 = vmatpush1.bf16.msra.mxu0 %v139
  %159 = vmatprep.subr.bf16.mxu0 0
  %160 = vmatpush1.bf16.msra.mxu0 %v140
  %161 = vmatprep.subr.bf16.mxu0 0
  %162 = vmatpush1.bf16.msra.mxu0 %v141
  %163 = vmatprep.subr.bf16.mxu0 0
  %164 = vmatpush1.bf16.msra.mxu0 %v142
  %165 = vmatprep.subr.bf16.mxu0 0
  %166 = vmatpush1.bf16.msra.mxu0 %v143
  %167 = vmatprep.subr.bf16.mxu0 0
  %168 = vmatpush1.bf16.msra.mxu0 %v144
  %169 = vmatprep.subr.bf16.mxu0 0
  %170 = vmatpush1.bf16.msra.mxu0 0
  %171 = vmatprep.subr.bf16.mxu0 0
  %172 = vmatpush1.bf16.msra.mxu0 0
  %173 = vmatprep.subr.bf16.mxu0 0
  %174 = vmatpush1.bf16.msra.mxu0 0
  %175 = vmatprep.subr.bf16.mxu0 0
  %176 = vmatpush1.bf16.msra.mxu0 0
  %177 = vmatprep.subr.bf16.mxu0 0
  %178 = vmatpush1.bf16.msra.mxu0 0
  %179 = vmatprep.subr.bf16.mxu0 0
  %180 = vmatpush1.bf16.msra.mxu0 0
  %181 = vmatprep.subr.bf16.mxu0 0
  %182 = vmatpush1.bf16.msra.mxu0 0
  %183 = vmatprep.subr.bf16.mxu0 0
  %184 = vmatpush1.bf16.msra.mxu0 0
  %185 = vmatprep.mubr.bf16.mxu0 0
  %186 = vmatmul.mubr.bf16.gmra.mrb[0].mxu0 %v89
  %v187 = vpop.f32.mrb[0].mxu0
  %v188 = vadd.f32 %v55, %v187
  %v189 = vpop.f32.mrb[0].mxu0
  %v190 = vpop.f32.mrb[0].mxu0
  %v191 = vadd.f32 %v55, %v190
  %v192 = vpop.f32.mrb[0].mxu0
  %193 = vmatprep.mubr.bf16.mxu0 0
  %194 = vmatmul.mubr.bf16.gmra.mrb[0].mxu0 %v90
  %v195 = vpop.f32.mrb[0].mxu0
  %v196 = vadd.f32 %v55, %v195
  %v197 = vpop.f32.mrb[0].mxu0
  %v198 = vpop.f32.mrb[0].mxu0
  %v199 = vadd.f32 %v55, %v198
  %v200 = vpop.f32.mrb[0].mxu0
  %201 = vmatprep.mubr.bf16.mxu0 0
  %202 = vmatmul.mubr.bf16.gmra.mrb[0].mxu0 %v91
  %v203 = vpop.f32.mrb[0].mxu0
  %v204 = vadd.f32 %v55, %v203
  %v205 = vpop.f32.mrb[0].mxu0
  %v206 = vpop.f32.mrb[0].mxu0
  %v207 = vadd.f32 %v55, %v206
  %v208 = vpop.f32.mrb[0].mxu0
  %209 = vmatprep.mubr.bf16.mxu0 0
  %210 = vmatmul.mubr.bf16.gmra.mrb[0].mxu0 %v92
  %v211 = vpop.f32.mrb[0].mxu0
  %v212 = vadd.f32 %v55, %v211
  %v213 = vpop.f32.mrb[0].mxu0
  %v214 = vpop.f32.mrb[0].mxu0
  %v215 = vadd.f32 %v55, %v214
  %v216 = vpop.f32.mrb[0].mxu0
  %217 = vmatprep.mubr.bf16.mxu0 0
  %218 = vmatmul.mubr.bf16.gmra.mrb[0].mxu0 %v93
  %v219 = vpop.f32.mrb[0].mxu0
  %v220 = vadd.f32 %v55, %v219
  %v221 = vpop.f32.mrb[0].mxu0
  %v222 = vpop.f32.mrb[0].mxu0
  %v223 = vadd.f32 %v55, %v222
  %v224 = vpop.f32.mrb[0].mxu0
  %225 = vmatprep.mubr.bf16.mxu0 0
  %226 = vmatmul.mubr.bf16.gmra.mrb[0].mxu0 %v94
  %v227 = vpop.f32.mrb[0].mxu0
  %v228 = vadd.f32 %v55, %v227
  %v229 = vpop.f32.mrb[0].mxu0
  %v230 = vpop.f32.mrb[0].mxu0
  %v231 = vadd.f32 %v55, %v230
  %v232 = vpop.f32.mrb[0].mxu0
  %233 = vmatprep.mubr.bf16.mxu0 0
  %234 = vmatmul.mubr.bf16.gmra.mrb[0].mxu0 %v95
  %v235 = vpop.f32.mrb[0].mxu0
  %v236 = vadd.f32 %v55, %v235
  %v237 = vpop.f32.mrb[0].mxu0
  %v238 = vpop.f32.mrb[0].mxu0
  %v239 = vadd.f32 %v55, %v238
  %v240 = vpop.f32.mrb[0].mxu0
  %241 = vmatprep.mubr.bf16.mxu0 0
  %242 = vmatmul.mubr.bf16.gmra.mrb[0].mxu0 %v96
  %v243 = vpop.f32.mrb[0].mxu0
  %v244 = vadd.f32 %v55, %v243
  %v245 = vpop.f32.mrb[0].mxu0
  %v246 = vpop.f32.mrb[0].mxu0
  %v247 = vadd.f32 %v55, %v246
  %v248 = vpop.f32.mrb[0].mxu0
  %249 = vdwg.mxu0
  %v250 = vmax.f32 %v188, 0.0
  %v251 = vmax.f32 %v191, 0.0
  %v252 = vmax.f32 %v196, 0.0
  %v253 = vmax.f32 %v199, 0.0
  %v254 = vmax.f32 %v204, 0.0
  %v255 = vmax.f32 %v207, 0.0
  %v256 = vmax.f32 %v212, 0.0
  %v257 = vmax.f32 %v215, 0.0
  %v258 = vmax.f32 %v220, 0.0
  %v259 = vmax.f32 %v223, 0.0
  %v260 = vmax.f32 %v228, 0.0
  %v261 = vmax.f32 %v231, 0.0
  %v262 = vmax.f32 %v236, 0.0
  %v263 = vmax.f32 %v239, 0.0
  %v264 = vmax.f32 %v244, 0.0
  %v265 = vmax.f32 %v247, 0.0
  %v266 = vpack.c.bf16 %v251, %v250
  %v267 = vpack.c.bf16 %v253, %v252
  %v268 = vpack.c.bf16 %v255, %v254
  %v269 = vpack.c.bf16 %v257, %v256
  %v270 = vpack.c.bf16 %v259, %v258
  %v271 = vpack.c.bf16 %v261, %v260
  %v272 = vpack.c.bf16 %v263, %v262
  %v273 = vpack.c.bf16 %v265, %v264
  %v282 = vunpack.c.l.b16 %v266
  %v283 = vunpack.c.h.b16 %v266
  %v284 = vunpack.c.l.b16 %v267
  %v285 = vunpack.c.h.b16 %v267
  %v286 = vunpack.c.l.b16 %v268
  %v287 = vunpack.c.h.b16 %v268
  %v288 = vunpack.c.l.b16 %v269
  %v289 = vunpack.c.h.b16 %v269
  %v290 = vunpack.c.l.b16 %v270
  %v291 = vunpack.c.h.b16 %v270
  %v292 = vunpack.c.l.b16 %v271
  %v293 = vunpack.c.h.b16 %v271
  %v294 = vunpack.c.l.b16 %v272
  %v295 = vunpack.c.h.b16 %v272
  %v296 = vunpack.c.l.b16 %v273
  %v297 = vunpack.c.h.b16 %v273
  %v298 = vpack.c.b16 %v282, %v282
  %v299 = vpack.c.b16 %v283, %v283
  %v300 = vpack.c.b16 %v284, %v284
  %v301 = vpack.c.b16 %v285, %v285
  %v302 = vpack.c.b16 %v286, %v286
  %v303 = vpack.c.b16 %v287, %v287
  %v304 = vpack.c.b16 %v288, %v288
  %v305 = vpack.c.b16 %v289, %v289
  %v306 = vpack.c.b16 %v290, %v290
  %v307 = vpack.c.b16 %v291, %v291
  %v308 = vpack.c.b16 %v292, %v292
  %v309 = vpack.c.b16 %v293, %v293
  %v310 = vpack.c.b16 %v294, %v294
  %v311 = vpack.c.b16 %v295, %v295
  %v312 = vpack.c.b16 %v296, %v296
  %v313 = vpack.c.b16 %v297, %v297
  %330 = vst [vmem:[%s4] sm:$0xf] %v298
  %331 = vst [vmem:[%s4 + $0x4] sm:$0xf] %v299
  %332 = vst [vmem:[%s4 + $0x8] sm:$0xf] %v300
  %333 = vst [vmem:[%s4 + $0xc] sm:$0xf] %v301
  %334 = vst [vmem:[%s4 + $0x10] sm:$0xf] %v302
  %335 = vst [vmem:[%s4 + $0x14] sm:$0xf] %v303
  %336 = vst [vmem:[%s4 + $0x18] sm:$0xf] %v304
  %337 = vst [vmem:[%s4 + $0x1c] sm:$0xf] %v305
  %338 = vst [vmem:[%s4 + $0x20] sm:$0xf] %v306
  %339 = vst [vmem:[%s4 + $0x24] sm:$0xf] %v307
  %340 = vst [vmem:[%s4 + $0x28] sm:$0xf] %v308
  %341 = vst [vmem:[%s4 + $0x2c] sm:$0xf] %v309
  %342 = vst [vmem:[%s4 + $0x30] sm:$0xf] %v310
  %343 = vst [vmem:[%s4 + $0x34] sm:$0xf] %v311
  %344 = vst [vmem:[%s4 + $0x38] sm:$0xf] %v312
  %345 = vst [vmem:[%s4 + $0x3c] sm:$0xf] %v313
  // Predicated region
  $region18: #{gcn_forward.5} parent=0 // pred_check
    _
  $region19: #{gcn_forward.5} parent=0 // pred_check_branch
    %347 = sbr.rel (0) target = $region21
  $region20: #{gcn_forward.5} parent=0 // pred_region
    _
  $region21: #{gcn_forward.5} parent=0 // pred_fallthru
    _
  // Predicated region
  $region22: #{gcn_forward.5} parent=0 // pred_check
    _
  $region23: #{gcn_forward.5} parent=0 // pred_check_branch
    %349 = sbr.rel (0) target = $region25
  $region24: #{gcn_forward.5} parent=0 // pred_region
    _
  $region25: #{gcn_forward.5} parent=0 // pred_fallthru
    _

// kernel: gcn_forward.4
$region0: #{gcn_forward.4}
  #allocation0 [shape = 'u32[]', space=smem, size = 0x4, offset = 0x4, fixed_abs, tag = 'smem constant byte address 0x4 - core index']
  #allocation1 [shape = 'u32[144,128]{1,0:T(1,128)}', space=vmem, size = 0x12000, scoped, tag = 'internal scratch']
  #allocation2 [shape = 'f32[128,128]{1,0:T(8,128)}', space=vmem, size = 0x10000, scoped, tag = 'scratch operand']
  %s0 = inlined_call_operand.vmem [shape: bf16[128,128], index: 0, kind: input, shape index: {}]
  %s1 = inlined_call_operand.vmem [shape: bf16[128,128], index: 1, kind: input, shape index: {}]
  %s2 = inlined_call_operand.vmem [shape: f32[128,1], index: 2, kind: input, shape index: {}, may-alias: {2,3}]
  %s3 = inlined_call_operand.vmem [shape: f32[128,1], index: 3, kind: input, shape index: {}, may-alias: {2,3}]
  %s4 = inlined_call_operand.vmem [shape: f32[1,128], index: 4, kind: input, shape index: {}]
  %s5 = inlined_call_operand.vmem [shape: bf16[128,128], index: 5, kind: output, shape index: {}]
  %s6 = sld [smem:[#allocation0]]
  $region38: #{gcn_forward.4} parent=0
    _
  %s8 = ssub.s32 1, %s6
  %s9 = scalar_select 0, %s8, %s6
  // Predicated region
  $region2: #{gcn_forward.4} parent=0 // pred_check
    _
  $region3: #{gcn_forward.4} parent=0 // pred_check_branch
    %11 = sbr.rel (0) target = $region5
  $region4: #{gcn_forward.4} parent=0 // pred_region
    _
  $region5: #{gcn_forward.4} parent=0 // pred_fallthru
    _
  // Predicated region
  $region6: #{gcn_forward.4} parent=0 // pred_check
    _
  $region7: #{gcn_forward.4} parent=0 // pred_check_branch
    %13 = sbr.rel (0) target = $region9
  $region8: #{gcn_forward.4} parent=0 // pred_region
    _
  $region9: #{gcn_forward.4} parent=0 // pred_fallthru
    _
  // Predicated region
  $region10: #{gcn_forward.4} parent=0 // pred_check
    _
  $region11: #{gcn_forward.4} parent=0 // pred_check_branch
    %15 = sbr.rel (0) target = $region13
  $region12: #{gcn_forward.4} parent=0 // pred_region
    _
  $region13: #{gcn_forward.4} parent=0 // pred_fallthru
    _
  // Predicated region
  $region14: #{gcn_forward.4} parent=0 // pred_check
    _
  $region15: #{gcn_forward.4} parent=0 // pred_check_branch
    %17 = sbr.rel (0) target = $region17
  $region16: #{gcn_forward.4} parent=0 // pred_region
    _
  $region17: #{gcn_forward.4} parent=0 // pred_fallthru
    _
  // Predicated region
  $region18: #{gcn_forward.4} parent=0 // pred_check
    _
  $region19: #{gcn_forward.4} parent=0 // pred_check_branch
    %19 = sbr.rel (0) target = $region21
  $region20: #{gcn_forward.4} parent=0 // pred_region
    _
  $region21: #{gcn_forward.4} parent=0 // pred_fallthru
    _
  %p21 = scmp.eq.s32.totalorder 0, 0
  // Predicated region
  $region22: #{gcn_forward.4} parent=0 // pred_check
    %p22 = pneg %p21
  $region23: #{gcn_forward.4} parent=0 // pred_check_branch
    %24 = sbr.rel (%p22) target = $region25
  $region24: #{gcn_forward.4} parent=0 // pred_region
    %25 = vst [vmem:[#allocation2] sm:$0xff] 0.0
    %26 = vst [vmem:[#allocation2 + $0x8] sm:$0xff] 0.0
    %27 = vst [vmem:[#allocation2 + $0x10] sm:$0xff] 0.0
    %28 = vst [vmem:[#allocation2 + $0x18] sm:$0xff] 0.0
    %29 = vst [vmem:[#allocation2 + $0x20] sm:$0xff] 0.0
    %30 = vst [vmem:[#allocation2 + $0x28] sm:$0xff] 0.0
    %31 = vst [vmem:[#allocation2 + $0x30] sm:$0xff] 0.0
    %32 = vst [vmem:[#allocation2 + $0x38] sm:$0xff] 0.0
    %33 = vst [vmem:[#allocation2 + $0x40] sm:$0xff] 0.0
    %34 = vst [vmem:[#allocation2 + $0x48] sm:$0xff] 0.0
    %35 = vst [vmem:[#allocation2 + $0x50] sm:$0xff] 0.0
    %36 = vst [vmem:[#allocation2 + $0x58] sm:$0xff] 0.0
    %37 = vst [vmem:[#allocation2 + $0x60] sm:$0xff] 0.0
    %38 = vst [vmem:[#allocation2 + $0x68] sm:$0xff] 0.0
    %39 = vst [vmem:[#allocation2 + $0x70] sm:$0xff] 0.0
    %40 = vst [vmem:[#allocation2 + $0x78] sm:$0xff] 0.0
  $region25: #{gcn_forward.4} parent=0 // pred_fallthru
    _
  %v41 = vld [vmem:[%s1] sm:$0xf]
  %v42 = vld [vmem:[%s1 + $0x4] sm:$0xf]
  %v43 = vld [vmem:[%s1 + $0x8] sm:$0xf]
  %v44 = vld [vmem:[%s1 + $0xc] sm:$0xf]
  %v45 = vld [vmem:[%s1 + $0x10] sm:$0xf]
  %v46 = vld [vmem:[%s1 + $0x14] sm:$0xf]
  %v47 = vld [vmem:[%s1 + $0x18] sm:$0xf]
  %v48 = vld [vmem:[%s1 + $0x1c] sm:$0xf]
  %v49 = vld [vmem:[%s1 + $0x20] sm:$0xf]
  %v50 = vld [vmem:[%s1 + $0x24] sm:$0xf]
  %v51 = vld [vmem:[%s1 + $0x28] sm:$0xf]
  %v52 = vld [vmem:[%s1 + $0x2c] sm:$0xf]
  %v53 = vld [vmem:[%s1 + $0x30] sm:$0xf]
  %v54 = vld [vmem:[%s1 + $0x34] sm:$0xf]
  %v55 = vld [vmem:[%s1 + $0x38] sm:$0xf]
  %v56 = vld [vmem:[%s1 + $0x3c] sm:$0xf]
  %v57 = vunpack.c.l.bf16 %v41
  %v58 = vunpack.c.l.bf16 %v42
  %v59 = vunpack.c.l.bf16 %v43
  %v60 = vunpack.c.l.bf16 %v44
  %v61 = vunpack.c.l.bf16 %v45
  %v62 = vunpack.c.l.bf16 %v46
  %v63 = vunpack.c.l.bf16 %v47
  %v64 = vunpack.c.l.bf16 %v48
  %v65 = vunpack.c.l.bf16 %v49
  %v66 = vunpack.c.l.bf16 %v50
  %v67 = vunpack.c.l.bf16 %v51
  %v68 = vunpack.c.l.bf16 %v52
  %v69 = vunpack.c.l.bf16 %v53
  %v70 = vunpack.c.l.bf16 %v54
  %v71 = vunpack.c.l.bf16 %v55
  %v72 = vunpack.c.l.bf16 %v56
  %v73 = vld [vmem:[%s2] sm:$0xff]
  %v74 = vld [vmem:[%s2 + $0x8] sm:$0xff]
  %v75 = vld [vmem:[%s2 + $0x10] sm:$0xff]
  %v76 = vld [vmem:[%s2 + $0x18] sm:$0xff]
  %v77 = vld [vmem:[%s2 + $0x20] sm:$0xff]
  %v78 = vld [vmem:[%s2 + $0x28] sm:$0xff]
  %v79 = vld [vmem:[%s2 + $0x30] sm:$0xff]
  %v80 = vld [vmem:[%s2 + $0x38] sm:$0xff]
  %v81 = vld [vmem:[%s2 + $0x40] sm:$0xff]
  %v82 = vld [vmem:[%s2 + $0x48] sm:$0xff]
  %v83 = vld [vmem:[%s2 + $0x50] sm:$0xff]
  %v84 = vld [vmem:[%s2 + $0x58] sm:$0xff]
  %v85 = vld [vmem:[%s2 + $0x60] sm:$0xff]
  %v86 = vld [vmem:[%s2 + $0x68] sm:$0xff]
  %v87 = vld [vmem:[%s2 + $0x70] sm:$0xff]
  %v88 = vld [vmem:[%s2 + $0x78] sm:$0xff]
  %90 = vset.pattern.permute.xlu0 0
  %91 = vperm.xlu0 %90, %v73
  %v92 = vpop.permute.xlu0 %91
  %95 = vset.pattern.permute.xlu0 0
  %96 = vperm.xlu0 %95, %v74
  %v97 = vpop.permute.xlu0 %96
  %100 = vset.pattern.permute.xlu0 0
  %101 = vperm.xlu0 %100, %v75
  %v102 = vpop.permute.xlu0 %101
  %105 = vset.pattern.permute.xlu0 0
  %106 = vperm.xlu0 %105, %v76
  %v107 = vpop.permute.xlu0 %106
  %110 = vset.pattern.permute.xlu0 0
  %111 = vperm.xlu0 %110, %v77
  %v112 = vpop.permute.xlu0 %111
  %115 = vset.pattern.permute.xlu0 0
  %116 = vperm.xlu0 %115, %v78
  %v117 = vpop.permute.xlu0 %116
  %120 = vset.pattern.permute.xlu0 0
  %121 = vperm.xlu0 %120, %v79
  %v122 = vpop.permute.xlu0 %121
  %125 = vset.pattern.permute.xlu0 0
  %126 = vperm.xlu0 %125, %v80
  %v127 = vpop.permute.xlu0 %126
  %130 = vset.pattern.permute.xlu0 0
  %131 = vperm.xlu0 %130, %v81
  %v132 = vpop.permute.xlu0 %131
  %135 = vset.pattern.permute.xlu0 0
  %136 = vperm.xlu0 %135, %v82
  %v137 = vpop.permute.xlu0 %136
  %140 = vset.pattern.permute.xlu0 0
  %141 = vperm.xlu0 %140, %v83
  %v142 = vpop.permute.xlu0 %141
  %145 = vset.pattern.permute.xlu0 0
  %146 = vperm.xlu0 %145, %v84
  %v147 = vpop.permute.xlu0 %146
  %150 = vset.pattern.permute.xlu0 0
  %151 = vperm.xlu0 %150, %v85
  %v152 = vpop.permute.xlu0 %151
  %155 = vset.pattern.permute.xlu0 0
  %156 = vperm.xlu0 %155, %v86
  %v157 = vpop.permute.xlu0 %156
  %160 = vset.pattern.permute.xlu0 0
  %161 = vperm.xlu0 %160, %v87
  %v162 = vpop.permute.xlu0 %161
  %165 = vset.pattern.permute.xlu0 0
  %166 = vperm.xlu0 %165, %v88
  %v167 = vpop.permute.xlu0 %166
  %v169 = vmul.f32 %v57, %v92
  %v170 = vmul.f32 %v58, %v97
  %v171 = vmul.f32 %v59, %v102
  %v172 = vmul.f32 %v60, %v107
  %v173 = vmul.f32 %v61, %v112
  %v174 = vmul.f32 %v62, %v117
  %v175 = vmul.f32 %v63, %v122
  %v176 = vmul.f32 %v64, %v127
  %v177 = vmul.f32 %v65, %v132
  %v178 = vmul.f32 %v66, %v137
  %v179 = vmul.f32 %v67, %v142
  %v180 = vmul.f32 %v68, %v147
  %v181 = vmul.f32 %v69, %v152
  %v182 = vmul.f32 %v70, %v157
  %v183 = vmul.f32 %v71, %v162
  %v184 = vmul.f32 %v72, %v167
  %v185 = vpack.c.bf16 %v170, %v169
  %v186 = vpack.c.bf16 %v172, %v171
  %v187 = vpack.c.bf16 %v174, %v173
  %v188 = vpack.c.bf16 %v176, %v175
  %v189 = vpack.c.bf16 %v178, %v177
  %v190 = vpack.c.bf16 %v180, %v179
  %v191 = vpack.c.bf16 %v182, %v181
  %v192 = vpack.c.bf16 %v184, %v183
  %v193 = vld [vmem:[#allocation2] sm:$0xff]
  %v194 = vld [vmem:[#allocation2 + $0x8] sm:$0xff]
  %v195 = vld [vmem:[#allocation2 + $0x10] sm:$0xff]
  %v196 = vld [vmem:[#allocation2 + $0x18] sm:$0xff]
  %v197 = vld [vmem:[#allocation2 + $0x20] sm:$0xff]
  %v198 = vld [vmem:[#allocation2 + $0x28] sm:$0xff]
  %v199 = vld [vmem:[#allocation2 + $0x30] sm:$0xff]
  %v200 = vld [vmem:[#allocation2 + $0x38] sm:$0xff]
  %v201 = vld [vmem:[#allocation2 + $0x40] sm:$0xff]
  %v202 = vld [vmem:[#allocation2 + $0x48] sm:$0xff]
  %v203 = vld [vmem:[#allocation2 + $0x50] sm:$0xff]
  %v204 = vld [vmem:[#allocation2 + $0x58] sm:$0xff]
  %v205 = vld [vmem:[#allocation2 + $0x60] sm:$0xff]
  %v206 = vld [vmem:[#allocation2 + $0x68] sm:$0xff]
  %v207 = vld [vmem:[#allocation2 + $0x70] sm:$0xff]
  %v208 = vld [vmem:[#allocation2 + $0x78] sm:$0xff]
  %v209 = vld [vmem:[%s0] sm:$0xf]
  %v210 = vld [vmem:[%s0 + $0x4] sm:$0xf]
  %v211 = vld [vmem:[%s0 + $0x8] sm:$0xf]
  %v212 = vld [vmem:[%s0 + $0xc] sm:$0xf]
  %v213 = vld [vmem:[%s0 + $0x10] sm:$0xf]
  %v214 = vld [vmem:[%s0 + $0x14] sm:$0xf]
  %v215 = vld [vmem:[%s0 + $0x18] sm:$0xf]
  %v216 = vld [vmem:[%s0 + $0x1c] sm:$0xf]
  %v217 = vld [vmem:[%s0 + $0x20] sm:$0xf]
  %v218 = vld [vmem:[%s0 + $0x24] sm:$0xf]
  %v219 = vld [vmem:[%s0 + $0x28] sm:$0xf]
  %v220 = vld [vmem:[%s0 + $0x2c] sm:$0xf]
  %v221 = vld [vmem:[%s0 + $0x30] sm:$0xf]
  %v222 = vld [vmem:[%s0 + $0x34] sm:$0xf]
  %v223 = vld [vmem:[%s0 + $0x38] sm:$0xf]
  %v224 = vld [vmem:[%s0 + $0x3c] sm:$0xf]
  %v241 = vunpack.c.l.b16 %v209
  %v242 = vunpack.c.l.b16 %v210
  %v243 = vunpack.c.l.b16 %v211
  %v244 = vunpack.c.l.b16 %v212
  %v245 = vunpack.c.l.b16 %v213
  %v246 = vunpack.c.l.b16 %v214
  %v247 = vunpack.c.l.b16 %v215
  %v248 = vunpack.c.l.b16 %v216
  %v249 = vunpack.c.l.b16 %v217
  %v250 = vunpack.c.l.b16 %v218
  %v251 = vunpack.c.l.b16 %v219
  %v252 = vunpack.c.l.b16 %v220
  %v253 = vunpack.c.l.b16 %v221
  %v254 = vunpack.c.l.b16 %v222
  %v255 = vunpack.c.l.b16 %v223
  %v256 = vunpack.c.l.b16 %v224
  %v257 = vpack.c.b16 %v242, %v241
  %v258 = vpack.c.b16 %v244, %v243
  %v259 = vpack.c.b16 %v246, %v245
  %v260 = vpack.c.b16 %v248, %v247
  %v261 = vpack.c.b16 %v250, %v249
  %v262 = vpack.c.b16 %v252, %v251
  %v263 = vpack.c.b16 %v254, %v253
  %v264 = vpack.c.b16 %v256, %v255
  %273 = vmatprep.subr.bf16.mxu0 0
  %274 = vmatpush1.bf16.msra.mxu0 %v185
  %275 = vmatprep.subr.bf16.mxu0 0
  %276 = vmatpush1.bf16.msra.mxu0 %v186
  %277 = vmatprep.subr.bf16.mxu0 0
  %278 = vmatpush1.bf16.msra.mxu0 %v187
  %279 = vmatprep.subr.bf16.mxu0 0
  %280 = vmatpush1.bf16.msra.mxu0 %v188
  %281 = vmatprep.subr.bf16.mxu0 0
  %282 = vmatpush1.bf16.msra.mxu0 %v189
  %283 = vmatprep.subr.bf16.mxu0 0
  %284 = vmatpush1.bf16.msra.mxu0 %v190
  %285 = vmatprep.subr.bf16.mxu0 0
  %286 = vmatpush1.bf16.msra.mxu0 %v191
  %287 = vmatprep.subr.bf16.mxu0 0
  %288 = vmatpush1.bf16.msra.mxu0 %v192
  %289 = vmatprep.subr.bf16.mxu0 0
  %290 = vmatpush1.bf16.msra.mxu0 0
  %291 = vmatprep.subr.bf16.mxu0 0
  %292 = vmatpush1.bf16.msra.mxu0 0
  %293 = vmatprep.subr.bf16.mxu0 0
  %294 = vmatpush1.bf16.msra.mxu0 0
  %295 = vmatprep.subr.bf16.mxu0 0
  %296 = vmatpush1.bf16.msra.mxu0 0
  %297 = vmatprep.subr.bf16.mxu0 0
  %298 = vmatpush1.bf16.msra.mxu0 0
  %299 = vmatprep.subr.bf16.mxu0 0
  %300 = vmatpush1.bf16.msra.mxu0 0
  %301 = vmatprep.subr.bf16.mxu0 0
  %302 = vmatpush1.bf16.msra.mxu0 0
  %303 = vmatprep.subr.bf16.mxu0 0
  %304 = vmatpush1.bf16.msra.mxu0 0
  %305 = vmatprep.mubr.bf16.mxu0 0
  %306 = vmatmul.mubr.bf16.gmra.mrb[0].mxu0 %v257
  %v307 = vpop.f32.mrb[0].mxu0
  %v308 = vadd.f32 0.0, %v307
  %v309 = vpop.f32.mrb[0].mxu0
  %v310 = vpop.f32.mrb[0].mxu0
  %v311 = vadd.f32 0.0, %v310
  %v312 = vpop.f32.mrb[0].mxu0
  %313 = vmatprep.mubr.bf16.mxu0 0
  %314 = vmatmul.mubr.bf16.gmra.mrb[0].mxu0 %v258
  %v315 = vpop.f32.mrb[0].mxu0
  %v316 = vadd.f32 0.0, %v315
  %v317 = vpop.f32.mrb[0].mxu0
  %v318 = vpop.f32.mrb[0].mxu0
  %v319 = vadd.f32 0.0, %v318
  %v320 = vpop.f32.mrb[0].mxu0
  %321 = vmatprep.mubr.bf16.mxu0 0
  %322 = vmatmul.mubr.bf16.gmra.mrb[0].mxu0 %v259
  %v323 = vpop.f32.mrb[0].mxu0
  %v324 = vadd.f32 0.0, %v323
  %v325 = vpop.f32.mrb[0].mxu0
  %v326 = vpop.f32.mrb[0].mxu0
  %v327 = vadd.f32 0.0, %v326
  %v328 = vpop.f32.mrb[0].mxu0
  %329 = vmatprep.mubr.bf16.mxu0 0
  %330 = vmatmul.mubr.bf16.gmra.mrb[0].mxu0 %v260
  %v331 = vpop.f32.mrb[0].mxu0
  %v332 = vadd.f32 0.0, %v331
  %v333 = vpop.f32.mrb[0].mxu0
  %v334 = vpop.f32.mrb[0].mxu0
  %v335 = vadd.f32 0.0, %v334
  %v336 = vpop.f32.mrb[0].mxu0
  %337 = vmatprep.mubr.bf16.mxu0 0
  %338 = vmatmul.mubr.bf16.gmra.mrb[0].mxu0 %v261
  %v339 = vpop.f32.mrb[0].mxu0
  %v340 = vadd.f32 0.0, %v339
  %v341 = vpop.f32.mrb[0].mxu0
  %v342 = vpop.f32.mrb[0].mxu0
  %v343 = vadd.f32 0.0, %v342
  %v344 = vpop.f32.mrb[0].mxu0
  %345 = vmatprep.mubr.bf16.mxu0 0
  %346 = vmatmul.mubr.bf16.gmra.mrb[0].mxu0 %v262
  %v347 = vpop.f32.mrb[0].mxu0
  %v348 = vadd.f32 0.0, %v347
  %v349 = vpop.f32.mrb[0].mxu0
  %v350 = vpop.f32.mrb[0].mxu0
  %v351 = vadd.f32 0.0, %v350
  %v352 = vpop.f32.mrb[0].mxu0
  %353 = vmatprep.mubr.bf16.mxu0 0
  %354 = vmatmul.mubr.bf16.gmra.mrb[0].mxu0 %v263
  %v355 = vpop.f32.mrb[0].mxu0
  %v356 = vadd.f32 0.0, %v355
  %v357 = vpop.f32.mrb[0].mxu0
  %v358 = vpop.f32.mrb[0].mxu0
  %v359 = vadd.f32 0.0, %v358
  %v360 = vpop.f32.mrb[0].mxu0
  %361 = vmatprep.mubr.bf16.mxu0 0
  %362 = vmatmul.mubr.bf16.gmra.mrb[0].mxu0 %v264
  %v363 = vpop.f32.mrb[0].mxu0
  %v364 = vadd.f32 0.0, %v363
  %v365 = vpop.f32.mrb[0].mxu0
  %v366 = vpop.f32.mrb[0].mxu0
  %v367 = vadd.f32 0.0, %v366
  %v368 = vpop.f32.mrb[0].mxu0
  %369 = vdwg.mxu0
  %v370 = vadd.f32 %v193, %v308
  %v371 = vadd.f32 %v194, %v311
  %v372 = vadd.f32 %v195, %v316
  %v373 = vadd.f32 %v196, %v319
  %v374 = vadd.f32 %v197, %v324
  %v375 = vadd.f32 %v198, %v327
  %v376 = vadd.f32 %v199, %v332
  %v377 = vadd.f32 %v200, %v335
  %v378 = vadd.f32 %v201, %v340
  %v379 = vadd.f32 %v202, %v343
  %v380 = vadd.f32 %v203, %v348
  %v381 = vadd.f32 %v204, %v351
  %v382 = vadd.f32 %v205, %v356
  %v383 = vadd.f32 %v206, %v359
  %v384 = vadd.f32 %v207, %v364
  %v385 = vadd.f32 %v208, %v367
  %386 = vst [vmem:[#allocation2] sm:$0xff] %v370
  %387 = vst [vmem:[#allocation2 + $0x8] sm:$0xff] %v371
  %388 = vst [vmem:[#allocation2 + $0x10] sm:$0xff] %v372
  %389 = vst [vmem:[#allocation2 + $0x18] sm:$0xff] %v373
  %390 = vst [vmem:[#allocation2 + $0x20] sm:$0xff] %v374
  %391 = vst [vmem:[#allocation2 + $0x28] sm:$0xff] %v375
  %392 = vst [vmem:[#allocation2 + $0x30] sm:$0xff] %v376
  %393 = vst [vmem:[#allocation2 + $0x38] sm:$0xff] %v377
  %394 = vst [vmem:[#allocation2 + $0x40] sm:$0xff] %v378
  %395 = vst [vmem:[#allocation2 + $0x48] sm:$0xff] %v379
  %396 = vst [vmem:[#allocation2 + $0x50] sm:$0xff] %v380
  %397 = vst [vmem:[#allocation2 + $0x58] sm:$0xff] %v381
  %398 = vst [vmem:[#allocation2 + $0x60] sm:$0xff] %v382
  %399 = vst [vmem:[#allocation2 + $0x68] sm:$0xff] %v383
  %400 = vst [vmem:[#allocation2 + $0x70] sm:$0xff] %v384
  %401 = vst [vmem:[#allocation2 + $0x78] sm:$0xff] %v385
  // Predicated region
  $region26: #{gcn_forward.4} parent=0 // pred_check
    %p402 = pneg %p21
  $region27: #{gcn_forward.4} parent=0 // pred_check_branch
    %404 = sbr.rel (%p402) target = $region29
  $region28: #{gcn_forward.4} parent=0 // pred_region
    %v405 = vld [vmem:[#allocation2] sm:$0xff]
    %v406 = vld [vmem:[#allocation2 + $0x8] sm:$0xff]
    %v407 = vld [vmem:[#allocation2 + $0x10] sm:$0xff]
    %v408 = vld [vmem:[#allocation2 + $0x18] sm:$0xff]
    %v409 = vld [vmem:[#allocation2 + $0x20] sm:$0xff]
    %v410 = vld [vmem:[#allocation2 + $0x28] sm:$0xff]
    %v411 = vld [vmem:[#allocation2 + $0x30] sm:$0xff]
    %v412 = vld [vmem:[#allocation2 + $0x38] sm:$0xff]
    %v413 = vld [vmem:[#allocation2 + $0x40] sm:$0xff]
    %v414 = vld [vmem:[#allocation2 + $0x48] sm:$0xff]
    %v415 = vld [vmem:[#allocation2 + $0x50] sm:$0xff]
    %v416 = vld [vmem:[#allocation2 + $0x58] sm:$0xff]
    %v417 = vld [vmem:[#allocation2 + $0x60] sm:$0xff]
    %v418 = vld [vmem:[#allocation2 + $0x68] sm:$0xff]
    %v419 = vld [vmem:[#allocation2 + $0x70] sm:$0xff]
    %v420 = vld [vmem:[#allocation2 + $0x78] sm:$0xff]
    %v421 = vld [vmem:[%s3] sm:$0xff]
    %v422 = vld [vmem:[%s3 + $0x8] sm:$0xff]
    %v423 = vld [vmem:[%s3 + $0x10] sm:$0xff]
    %v424 = vld [vmem:[%s3 + $0x18] sm:$0xff]
    %v425 = vld [vmem:[%s3 + $0x20] sm:$0xff]
    %v426 = vld [vmem:[%s3 + $0x28] sm:$0xff]
    %v427 = vld [vmem:[%s3 + $0x30] sm:$0xff]
    %v428 = vld [vmem:[%s3 + $0x38] sm:$0xff]
    %v429 = vld [vmem:[%s3 + $0x40] sm:$0xff]
    %v430 = vld [vmem:[%s3 + $0x48] sm:$0xff]
    %v431 = vld [vmem:[%s3 + $0x50] sm:$0xff]
    %v432 = vld [vmem:[%s3 + $0x58] sm:$0xff]
    %v433 = vld [vmem:[%s3 + $0x60] sm:$0xff]
    %v434 = vld [vmem:[%s3 + $0x68] sm:$0xff]
    %v435 = vld [vmem:[%s3 + $0x70] sm:$0xff]
    %v436 = vld [vmem:[%s3 + $0x78] sm:$0xff]
    %438 = vset.pattern.permute.xlu0 0
    %439 = vperm.xlu0 %438, %v421
    %v440 = vpop.permute.xlu0 %439
    %443 = vset.pattern.permute.xlu0 0
    %444 = vperm.xlu0 %443, %v422
    %v445 = vpop.permute.xlu0 %444
    %448 = vset.pattern.permute.xlu0 0
    %449 = vperm.xlu0 %448, %v423
    %v450 = vpop.permute.xlu0 %449
    %453 = vset.pattern.permute.xlu0 0
    %454 = vperm.xlu0 %453, %v424
    %v455 = vpop.permute.xlu0 %454
    %458 = vset.pattern.permute.xlu0 0
    %459 = vperm.xlu0 %458, %v425
    %v460 = vpop.permute.xlu0 %459
    %463 = vset.pattern.permute.xlu0 0
    %464 = vperm.xlu0 %463, %v426
    %v465 = vpop.permute.xlu0 %464
    %468 = vset.pattern.permute.xlu0 0
    %469 = vperm.xlu0 %468, %v427
    %v470 = vpop.permute.xlu0 %469
    %473 = vset.pattern.permute.xlu0 0
    %474 = vperm.xlu0 %473, %v428
    %v475 = vpop.permute.xlu0 %474
    %478 = vset.pattern.permute.xlu0 0
    %479 = vperm.xlu0 %478, %v429
    %v480 = vpop.permute.xlu0 %479
    %483 = vset.pattern.permute.xlu0 0
    %484 = vperm.xlu0 %483, %v430
    %v485 = vpop.permute.xlu0 %484
    %488 = vset.pattern.permute.xlu0 0
    %489 = vperm.xlu0 %488, %v431
    %v490 = vpop.permute.xlu0 %489
    %493 = vset.pattern.permute.xlu0 0
    %494 = vperm.xlu0 %493, %v432
    %v495 = vpop.permute.xlu0 %494
    %498 = vset.pattern.permute.xlu0 0
    %499 = vperm.xlu0 %498, %v433
    %v500 = vpop.permute.xlu0 %499
    %503 = vset.pattern.permute.xlu0 0
    %504 = vperm.xlu0 %503, %v434
    %v505 = vpop.permute.xlu0 %504
    %508 = vset.pattern.permute.xlu0 0
    %509 = vperm.xlu0 %508, %v435
    %v510 = vpop.permute.xlu0 %509
    %513 = vset.pattern.permute.xlu0 0
    %514 = vperm.xlu0 %513, %v436
    %v515 = vpop.permute.xlu0 %514
    %v517 = vmul.f32 %v405, %v440
    %v518 = vmul.f32 %v406, %v445
    %v519 = vmul.f32 %v407, %v450
    %v520 = vmul.f32 %v408, %v455
    %v521 = vmul.f32 %v409, %v460
    %v522 = vmul.f32 %v410, %v465
    %v523 = vmul.f32 %v411, %v470
    %v524 = vmul.f32 %v412, %v475
    %v525 = vmul.f32 %v413, %v480
    %v526 = vmul.f32 %v414, %v485
    %v527 = vmul.f32 %v415, %v490
    %v528 = vmul.f32 %v416, %v495
    %v529 = vmul.f32 %v417, %v500
    %v530 = vmul.f32 %v418, %v505
    %v531 = vmul.f32 %v419, %v510
    %v532 = vmul.f32 %v420, %v515
    %v533 = vpack.c.bf16 %v518, %v517
    %v534 = vpack.c.bf16 %v520, %v519
    %v535 = vpack.c.bf16 %v522, %v521
    %v536 = vpack.c.bf16 %v524, %v523
    %v537 = vpack.c.bf16 %v526, %v525
    %v538 = vpack.c.bf16 %v528, %v527
    %v539 = vpack.c.bf16 %v530, %v529
    %v540 = vpack.c.bf16 %v532, %v531
    %v549 = vunpack.c.l.b16 %v533
    %v550 = vunpack.c.h.b16 %v533
    %v551 = vunpack.c.l.b16 %v534
    %v552 = vunpack.c.h.b16 %v534
    %v553 = vunpack.c.l.b16 %v535
    %v554 = vunpack.c.h.b16 %v535
    %v555 = vunpack.c.l.b16 %v536
    %v556 = vunpack.c.h.b16 %v536
    %v557 = vunpack.c.l.b16 %v537
    %v558 = vunpack.c.h.b16 %v537
    %v559 = vunpack.c.l.b16 %v538
    %v560 = vunpack.c.h.b16 %v538
    %v561 = vunpack.c.l.b16 %v539
    %v562 = vunpack.c.h.b16 %v539
    %v563 = vunpack.c.l.b16 %v540
    %v564 = vunpack.c.h.b16 %v540
    %v565 = vpack.c.b16 %v549, %v549
    %v566 = vpack.c.b16 %v550, %v550
    %v567 = vpack.c.b16 %v551, %v551
    %v568 = vpack.c.b16 %v552, %v552
    %v569 = vpack.c.b16 %v553, %v553
    %v570 = vpack.c.b16 %v554, %v554
    %v571 = vpack.c.b16 %v555, %v555
    %v572 = vpack.c.b16 %v556, %v556
    %v573 = vpack.c.b16 %v557, %v557
    %v574 = vpack.c.b16 %v558, %v558
    %v575 = vpack.c.b16 %v559, %v559
    %v576 = vpack.c.b16 %v560, %v560
    %v577 = vpack.c.b16 %v561, %v561
    %v578 = vpack.c.b16 %v562, %v562
    %v579 = vpack.c.b16 %v563, %v563
    %v580 = vpack.c.b16 %v564, %v564
    %597 = vst [vmem:[%s5] sm:$0xf] %v565
    %598 = vst [vmem:[%s5 + $0x4] sm:$0xf] %v566
    %599 = vst [vmem:[%s5 + $0x8] sm:$0xf] %v567
    %600 = vst [vmem:[%s5 + $0xc] sm:$0xf] %v568
    %601 = vst [vmem:[%s5 + $0x10] sm:$0xf] %v569
    %602 = vst [vmem:[%s5 + $0x14] sm:$0xf] %v570
    %603 = vst [vmem:[%s5 + $0x18] sm:$0xf] %v571
    %604 = vst [vmem:[%s5 + $0x1c] sm:$0xf] %v572
    %605 = vst [vmem:[%s5 + $0x20] sm:$0xf] %v573
    %606 = vst [vmem:[%s5 + $0x24] sm:$0xf] %v574
    %607 = vst [vmem:[%s5 + $0x28] sm:$0xf] %v575
    %608 = vst [vmem:[%s5 + $0x2c] sm:$0xf] %v576
    %609 = vst [vmem:[%s5 + $0x30] sm:$0xf] %v577
    %610 = vst [vmem:[%s5 + $0x34] sm:$0xf] %v578
    %611 = vst [vmem:[%s5 + $0x38] sm:$0xf] %v579
    %612 = vst [vmem:[%s5 + $0x3c] sm:$0xf] %v580
  $region29: #{gcn_forward.4} parent=0 // pred_fallthru
    _
  // Predicated region
  $region30: #{gcn_forward.4} parent=0 // pred_check
    _
  $region31: #{gcn_forward.4} parent=0 // pred_check_branch
    %614 = sbr.rel (0) target = $region33
  $region32: #{gcn_forward.4} parent=0 // pred_region
    _
  $region33: #{gcn_forward.4} parent=0 // pred_fallthru
    _
  // Predicated region
  $region34: #{gcn_forward.4} parent=0 // pred_check
    _
  $region35: #{gcn_forward.4} parent=0 // pred_check_branch
    %616 = sbr.rel (0) target = $region37
  $region36: #{gcn_forward.4} parent=0 // pred_region
    _
  $region37: #{gcn_forward.4} parent=0 // pred_fallthru
    _

// kernel: gcn_forward.7
$region0: #{gcn_forward.7}
  #allocation0 [shape = 'u32[]', space=smem, size = 0x4, offset = 0x4, fixed_abs, tag = 'smem constant byte address 0x4 - core index']
  #allocation1 [shape = 'u32[144,128]{1,0:T(1,128)}', space=vmem, size = 0x12000, scoped, tag = 'internal scratch']
  %s0 = inlined_call_operand.vmem [shape: bf16[128,128], index: 0, kind: input, shape index: {}]
  %s1 = inlined_call_operand.vmem [shape: f32[128,1], index: 1, kind: input, shape index: {}]
  %s2 = inlined_call_operand.vmem [shape: bf16[128,128], index: 2, kind: input, shape index: {}]
  %s3 = inlined_call_operand.vmem [shape: f32[1,128], index: 3, kind: input, shape index: {}]
  %s4 = inlined_call_operand.vmem [shape: f32[128,128], index: 4, kind: output, shape index: {}]
  %s5 = sld [smem:[#allocation0]]
  $region26: #{gcn_forward.7} parent=0
    _
  %s7 = ssub.s32 1, %s5
  %s8 = scalar_select 0, %s7, %s5
  // Predicated region
  $region2: #{gcn_forward.7} parent=0 // pred_check
    _
  $region3: #{gcn_forward.7} parent=0 // pred_check_branch
    %10 = sbr.rel (0) target = $region5
  $region4: #{gcn_forward.7} parent=0 // pred_region
    _
  $region5: #{gcn_forward.7} parent=0 // pred_fallthru
    _
  // Predicated region
  $region6: #{gcn_forward.7} parent=0 // pred_check
    _
  $region7: #{gcn_forward.7} parent=0 // pred_check_branch
    %12 = sbr.rel (0) target = $region9
  $region8: #{gcn_forward.7} parent=0 // pred_region
    _
  $region9: #{gcn_forward.7} parent=0 // pred_fallthru
    _
  // Predicated region
  $region10: #{gcn_forward.7} parent=0 // pred_check
    _
  $region11: #{gcn_forward.7} parent=0 // pred_check_branch
    %14 = sbr.rel (0) target = $region13
  $region12: #{gcn_forward.7} parent=0 // pred_region
    _
  $region13: #{gcn_forward.7} parent=0 // pred_fallthru
    _
  // Predicated region
  $region14: #{gcn_forward.7} parent=0 // pred_check
    _
  $region15: #{gcn_forward.7} parent=0 // pred_check_branch
    %16 = sbr.rel (0) target = $region17
  $region16: #{gcn_forward.7} parent=0 // pred_region
    _
  $region17: #{gcn_forward.7} parent=0 // pred_fallthru
    _
  %v18 = vld [vmem:[%s0] sm:$0xf]
  %v19 = vld [vmem:[%s0 + $0x4] sm:$0xf]
  %v20 = vld [vmem:[%s0 + $0x8] sm:$0xf]
  %v21 = vld [vmem:[%s0 + $0xc] sm:$0xf]
  %v22 = vld [vmem:[%s0 + $0x10] sm:$0xf]
  %v23 = vld [vmem:[%s0 + $0x14] sm:$0xf]
  %v24 = vld [vmem:[%s0 + $0x18] sm:$0xf]
  %v25 = vld [vmem:[%s0 + $0x1c] sm:$0xf]
  %v26 = vld [vmem:[%s0 + $0x20] sm:$0xf]
  %v27 = vld [vmem:[%s0 + $0x24] sm:$0xf]
  %v28 = vld [vmem:[%s0 + $0x28] sm:$0xf]
  %v29 = vld [vmem:[%s0 + $0x2c] sm:$0xf]
  %v30 = vld [vmem:[%s0 + $0x30] sm:$0xf]
  %v31 = vld [vmem:[%s0 + $0x34] sm:$0xf]
  %v32 = vld [vmem:[%s0 + $0x38] sm:$0xf]
  %v33 = vld [vmem:[%s0 + $0x3c] sm:$0xf]
  %v34 = vld [vmem:[%s2] sm:$0xf]
  %v35 = vld [vmem:[%s2 + $0x4] sm:$0xf]
  %v36 = vld [vmem:[%s2 + $0x8] sm:$0xf]
  %v37 = vld [vmem:[%s2 + $0xc] sm:$0xf]
  %v38 = vld [vmem:[%s2 + $0x10] sm:$0xf]
  %v39 = vld [vmem:[%s2 + $0x14] sm:$0xf]
  %v40 = vld [vmem:[%s2 + $0x18] sm:$0xf]
  %v41 = vld [vmem:[%s2 + $0x1c] sm:$0xf]
  %v42 = vld [vmem:[%s2 + $0x20] sm:$0xf]
  %v43 = vld [vmem:[%s2 + $0x24] sm:$0xf]
  %v44 = vld [vmem:[%s2 + $0x28] sm:$0xf]
  %v45 = vld [vmem:[%s2 + $0x2c] sm:$0xf]
  %v46 = vld [vmem:[%s2 + $0x30] sm:$0xf]
  %v47 = vld [vmem:[%s2 + $0x34] sm:$0xf]
  %v48 = vld [vmem:[%s2 + $0x38] sm:$0xf]
  %v49 = vld [vmem:[%s2 + $0x3c] sm:$0xf]
  %v50 = vld [vmem:[%s3] sm:$0x1]
  %v52 = vlaneseq
  %v53 = vshrl.u32 %v52, 7
  %v54 = vsub.s32 0, %v53
  %v55 = vrot.slane %v50, %v54
  %v73 = vunpack.c.l.b16 %v18
  %v74 = vunpack.c.l.b16 %v19
  %v75 = vunpack.c.l.b16 %v20
  %v76 = vunpack.c.l.b16 %v21
  %v77 = vunpack.c.l.b16 %v22
  %v78 = vunpack.c.l.b16 %v23
  %v79 = vunpack.c.l.b16 %v24
  %v80 = vunpack.c.l.b16 %v25
  %v81 = vunpack.c.l.b16 %v26
  %v82 = vunpack.c.l.b16 %v27
  %v83 = vunpack.c.l.b16 %v28
  %v84 = vunpack.c.l.b16 %v29
  %v85 = vunpack.c.l.b16 %v30
  %v86 = vunpack.c.l.b16 %v31
  %v87 = vunpack.c.l.b16 %v32
  %v88 = vunpack.c.l.b16 %v33
  %v89 = vpack.c.b16 %v74, %v73
  %v90 = vpack.c.b16 %v76, %v75
  %v91 = vpack.c.b16 %v78, %v77
  %v92 = vpack.c.b16 %v80, %v79
  %v93 = vpack.c.b16 %v82, %v81
  %v94 = vpack.c.b16 %v84, %v83
  %v95 = vpack.c.b16 %v86, %v85
  %v96 = vpack.c.b16 %v88, %v87
  %v121 = vunpack.c.l.b16 %v34
  %v122 = vunpack.c.l.b16 %v35
  %v123 = vunpack.c.l.b16 %v36
  %v124 = vunpack.c.l.b16 %v37
  %v125 = vunpack.c.l.b16 %v38
  %v126 = vunpack.c.l.b16 %v39
  %v127 = vunpack.c.l.b16 %v40
  %v128 = vunpack.c.l.b16 %v41
  %v129 = vunpack.c.l.b16 %v42
  %v130 = vunpack.c.l.b16 %v43
  %v131 = vunpack.c.l.b16 %v44
  %v132 = vunpack.c.l.b16 %v45
  %v133 = vunpack.c.l.b16 %v46
  %v134 = vunpack.c.l.b16 %v47
  %v135 = vunpack.c.l.b16 %v48
  %v136 = vunpack.c.l.b16 %v49
  %v137 = vpack.c.b16 %v122, %v121
  %v138 = vpack.c.b16 %v124, %v123
  %v139 = vpack.c.b16 %v126, %v125
  %v140 = vpack.c.b16 %v128, %v127
  %v141 = vpack.c.b16 %v130, %v129
  %v142 = vpack.c.b16 %v132, %v131
  %v143 = vpack.c.b16 %v134, %v133
  %v144 = vpack.c.b16 %v136, %v135
  %153 = vmatprep.subr.bf16.mxu0 0
  %154 = vmatpush1.bf16.msra.mxu0 %v137
  %155 = vmatprep.subr.bf16.mxu0 0
  %156 = vmatpush1.bf16.msra.mxu0 %v138
  %157 = vmatprep.subr.bf16.mxu0 0
  %158 = vmatpush1.bf16.msra.mxu0 %v139
  %159 = vmatprep.subr.bf16.mxu0 0
  %160 = vmatpush1.bf16.msra.mxu0 %v140
  %161 = vmatprep.subr.bf16.mxu0 0
  %162 = vmatpush1.bf16.msra.mxu0 %v141
  %163 = vmatprep.subr.bf16.mxu0 0
  %164 = vmatpush1.bf16.msra.mxu0 %v142
  %165 = vmatprep.subr.bf16.mxu0 0
  %166 = vmatpush1.bf16.msra.mxu0 %v143
  %167 = vmatprep.subr.bf16.mxu0 0
  %168 = vmatpush1.bf16.msra.mxu0 %v144
  %169 = vmatprep.subr.bf16.mxu0 0
  %170 = vmatpush1.bf16.msra.mxu0 0
  %171 = vmatprep.subr.bf16.mxu0 0
  %172 = vmatpush1.bf16.msra.mxu0 0
  %173 = vmatprep.subr.bf16.mxu0 0
  %174 = vmatpush1.bf16.msra.mxu0 0
  %175 = vmatprep.subr.bf16.mxu0 0
  %176 = vmatpush1.bf16.msra.mxu0 0
  %177 = vmatprep.subr.bf16.mxu0 0
  %178 = vmatpush1.bf16.msra.mxu0 0
  %179 = vmatprep.subr.bf16.mxu0 0
  %180 = vmatpush1.bf16.msra.mxu0 0
  %181 = vmatprep.subr.bf16.mxu0 0
  %182 = vmatpush1.bf16.msra.mxu0 0
  %183 = vmatprep.subr.bf16.mxu0 0
  %184 = vmatpush1.bf16.msra.mxu0 0
  %185 = vmatprep.mubr.bf16.mxu0 0
  %186 = vmatmul.mubr.bf16.gmra.mrb[0].mxu0 %v89
  %v187 = vpop.f32.mrb[0].mxu0
  %v188 = vadd.f32 %v55, %v187
  %v189 = vpop.f32.mrb[0].mxu0
  %v190 = vpop.f32.mrb[0].mxu0
  %v191 = vadd.f32 %v55, %v190
  %v192 = vpop.f32.mrb[0].mxu0
  %193 = vmatprep.mubr.bf16.mxu0 0
  %194 = vmatmul.mubr.bf16.gmra.mrb[0].mxu0 %v90
  %v195 = vpop.f32.mrb[0].mxu0
  %v196 = vadd.f32 %v55, %v195
  %v197 = vpop.f32.mrb[0].mxu0
  %v198 = vpop.f32.mrb[0].mxu0
  %v199 = vadd.f32 %v55, %v198
  %v200 = vpop.f32.mrb[0].mxu0
  %201 = vmatprep.mubr.bf16.mxu0 0
  %202 = vmatmul.mubr.bf16.gmra.mrb[0].mxu0 %v91
  %v203 = vpop.f32.mrb[0].mxu0
  %v204 = vadd.f32 %v55, %v203
  %v205 = vpop.f32.mrb[0].mxu0
  %v206 = vpop.f32.mrb[0].mxu0
  %v207 = vadd.f32 %v55, %v206
  %v208 = vpop.f32.mrb[0].mxu0
  %209 = vmatprep.mubr.bf16.mxu0 0
  %210 = vmatmul.mubr.bf16.gmra.mrb[0].mxu0 %v92
  %v211 = vpop.f32.mrb[0].mxu0
  %v212 = vadd.f32 %v55, %v211
  %v213 = vpop.f32.mrb[0].mxu0
  %v214 = vpop.f32.mrb[0].mxu0
  %v215 = vadd.f32 %v55, %v214
  %v216 = vpop.f32.mrb[0].mxu0
  %217 = vmatprep.mubr.bf16.mxu0 0
  %218 = vmatmul.mubr.bf16.gmra.mrb[0].mxu0 %v93
  %v219 = vpop.f32.mrb[0].mxu0
  %v220 = vadd.f32 %v55, %v219
  %v221 = vpop.f32.mrb[0].mxu0
  %v222 = vpop.f32.mrb[0].mxu0
  %v223 = vadd.f32 %v55, %v222
  %v224 = vpop.f32.mrb[0].mxu0
  %225 = vmatprep.mubr.bf16.mxu0 0
  %226 = vmatmul.mubr.bf16.gmra.mrb[0].mxu0 %v94
  %v227 = vpop.f32.mrb[0].mxu0
  %v228 = vadd.f32 %v55, %v227
  %v229 = vpop.f32.mrb[0].mxu0
  %v230 = vpop.f32.mrb[0].mxu0
  %v231 = vadd.f32 %v55, %v230
  %v232 = vpop.f32.mrb[0].mxu0
  %233 = vmatprep.mubr.bf16.mxu0 0
  %234 = vmatmul.mubr.bf16.gmra.mrb[0].mxu0 %v95
  %v235 = vpop.f32.mrb[0].mxu0
  %v236 = vadd.f32 %v55, %v235
  %v237 = vpop.f32.mrb[0].mxu0
  %v238 = vpop.f32.mrb[0].mxu0
  %v239 = vadd.f32 %v55, %v238
  %v240 = vpop.f32.mrb[0].mxu0
  %241 = vmatprep.mubr.bf16.mxu0 0
  %242 = vmatmul.mubr.bf16.gmra.mrb[0].mxu0 %v96
  %v243 = vpop.f32.mrb[0].mxu0
  %v244 = vadd.f32 %v55, %v243
  %v245 = vpop.f32.mrb[0].mxu0
  %v246 = vpop.f32.mrb[0].mxu0
  %v247 = vadd.f32 %v55, %v246
  %v248 = vpop.f32.mrb[0].mxu0
  %249 = vdwg.mxu0
  %250 = vst [vmem:[%s4] sm:$0xff] %v188
  %251 = vst [vmem:[%s4 + $0x8] sm:$0xff] %v191
  %252 = vst [vmem:[%s4 + $0x10] sm:$0xff] %v196
  %253 = vst [vmem:[%s4 + $0x18] sm:$0xff] %v199
  %254 = vst [vmem:[%s4 + $0x20] sm:$0xff] %v204
  %255 = vst [vmem:[%s4 + $0x28] sm:$0xff] %v207
  %256 = vst [vmem:[%s4 + $0x30] sm:$0xff] %v212
  %257 = vst [vmem:[%s4 + $0x38] sm:$0xff] %v215
  %258 = vst [vmem:[%s4 + $0x40] sm:$0xff] %v220
  %259 = vst [vmem:[%s4 + $0x48] sm:$0xff] %v223
  %260 = vst [vmem:[%s4 + $0x50] sm:$0xff] %v228
  %261 = vst [vmem:[%s4 + $0x58] sm:$0xff] %v231
  %262 = vst [vmem:[%s4 + $0x60] sm:$0xff] %v236
  %263 = vst [vmem:[%s4 + $0x68] sm:$0xff] %v239
  %264 = vst [vmem:[%s4 + $0x70] sm:$0xff] %v244
  %265 = vst [vmem:[%s4 + $0x78] sm:$0xff] %v247
  // Predicated region
  $region18: #{gcn_forward.7} parent=0 // pred_check
    _
  $region19: #{gcn_forward.7} parent=0 // pred_check_branch
    %267 = sbr.rel (0) target = $region21
  $region20: #{gcn_forward.7} parent=0 // pred_region
    _
  $region21: #{gcn_forward.7} parent=0 // pred_fallthru
    _
  // Predicated region
  $region22: #{gcn_forward.7} parent=0 // pred_check
    _
  $region23: #{gcn_forward.7} parent=0 // pred_check_branch
    %269 = sbr.rel (0) target = $region25
  $region24: #{gcn_forward.7} parent=0 // pred_region
    _
  $region25: #{gcn_forward.7} parent=0 // pred_fallthru
    _

</llo_original>
